<compile_context>
chip_gen: v5e
topology: v5e:2x2
jax: 0.10.0
libtpu: 0.0.40
codegen_flags: <defaults>
</compile_context>

<pallas_src>
import functools

import jax
import jax.numpy as jnp
from jax.experimental import pallas as pl
from jax.experimental.pallas import tpu as pltpu

_LANE = 128        # padded output-feature dims are multiples of the lane width
_BATCH_ALIGN = 16  # bf16 packs 16 rows per vreg, so align batch tiles to 16


def _round_up(n, m):
    return ((n + m - 1) // m) * m


def _cdiv(a, b):
    return -(-a // b)


def _mlp_kernel(num_layers, out_pdims, x_ref, *refs):
    """refs = (w0, ..., w_{L-1}, b_packed, out_ref).

    x_ref:  [tile_b, d_in]        f32 (cast to bf16 in-kernel)
    w_i:    [pdims[i], pdims[i+1]] bf16 (resident; layer-0 K is the real input_dim)
    b_pack: [L, d_max_pad]         f32 (resident)
    out:    [tile_b, pdims[-1]]    out_dtype (lane-dense, 128-multiple store)
    """
    w_refs = refs[:num_layers]
    b_ref = refs[num_layers]
    out_ref = refs[num_layers + 1]

    h = x_ref[...].astype(jnp.bfloat16)                 # stream f32, feed bf16 to the MXU
    for i in range(num_layers):
        acc = jnp.dot(h, w_refs[i][...], preferred_element_type=jnp.float32)
        acc = acc + b_ref[i:i + 1, :out_pdims[i]]        # f32 bias (static slice of packed biases)
        if i < num_layers - 1:                           # ReLU after every layer except the last
            h = jnp.maximum(acc, 0.0).astype(jnp.bfloat16)
        else:
            out_ref[...] = acc.astype(out_ref.dtype)


def prepare_params(weights, biases):
    """One-time pad/cast of the parameter set (reused across many forward calls).

    weights: list of [in_i, out_i] float arrays; biases: list of [out_i] or [1, out_i].
    Padding is with zeros, so the math stays exact; layer-0 K is left unpadded so x can be
    streamed with its real feature dim.
    """
    num_layers = len(weights)
    assert len(biases) == num_layers
    dims = [int(weights[0].shape[0])] + [int(w.shape[1]) for w in weights]
    pdims = [dims[0]] + [_round_up(d, _LANE) for d in dims[1:]]

    w_padded = []
    for i, w in enumerate(weights):
        assert int(w.shape[0]) == dims[i]
        wp = jnp.zeros((pdims[i], pdims[i + 1]), jnp.bfloat16)
        wp = wp.at[:dims[i], :dims[i + 1]].set(jnp.asarray(w, jnp.float32).astype(jnp.bfloat16))
        w_padded.append(wp)

    d_max = max(pdims[1:])
    b_packed = jnp.zeros((num_layers, d_max), jnp.float32)
    for i, b in enumerate(biases):
        b_packed = b_packed.at[i, :dims[i + 1]].set(jnp.asarray(b, jnp.float32).reshape(-1))

    return dict(weights=tuple(w_padded), biases=b_packed,
                dims=tuple(dims), pdims=tuple(pdims))


def deep_q_net_forward(x, params, *, block_batch=1024, out_dtype=jnp.float32):
    """Fused MLP forward.  x: [B, input_dim] f32 -> [B, output_dim] out_dtype."""
    weights = params["weights"]
    b_packed = params["biases"]
    dims = params["dims"]
    pdims = params["pdims"]
    num_layers = len(weights)

    B, d_in = x.shape
    assert d_in == dims[0]

    # ---- batch tiling: megacore-aware (>=2 tiles when enough work), 16-row aligned ----------
    b_pad = _round_up(B, _BATCH_ALIGN)
    tile_b = max(_BATCH_ALIGN, min(block_batch, _round_up(_cdiv(b_pad, 2), _BATCH_ALIGN)))
    b_pad = _round_up(b_pad, tile_b)
    nb = b_pad // tile_b

    xp = x if b_pad == B else jnp.zeros((b_pad, d_in), x.dtype).at[:B].set(x)
    xp = xp.astype(jnp.float32)

    # ---- BlockSpecs: x/out batch-tiled; params resident (constant index_map) -----------------
    x_spec = pl.BlockSpec((tile_b, d_in), lambda i: (i, 0))
    out_spec = pl.BlockSpec((tile_b, pdims[-1]), lambda i: (i, 0))

    def _param_specs(single_buffer):
        kw = dict(pipeline_mode=pl.Buffered(1)) if single_buffer else {}
        specs = [pl.BlockSpec((pdims[i], pdims[i + 1]), lambda i_: (0, 0), **kw)
                 for i in range(num_layers)]
        specs.append(pl.BlockSpec(tuple(b_packed.shape), lambda i_: (0, 0), **kw))
        return specs

    # ---- advisory cost estimate ---------------------------------------------------------------
    flops = 2 * b_pad * sum(pdims[i] * pdims[i + 1] for i in range(num_layers))
    param_bytes = sum(pdims[i] * pdims[i + 1] * 2 for i in range(num_layers)) + b_packed.size * 4
    out_itemsize = jnp.dtype(out_dtype).itemsize
    bytes_accessed = param_bytes + b_pad * d_in * 4 + b_pad * pdims[-1] * out_itemsize
    cost = pl.CostEstimate(flops=flops, transcendentals=0, bytes_accessed=bytes_accessed)

    # ---- generation-aware VMEM budget ---------------------------------------------------------
    max_d = max(pdims)

    def _vmem_limit(single_buffer):
        vmem_need = ((1 if single_buffer else 2) * param_bytes   # resident params
                     + 2 * tile_b * d_in * 4                     # double-buffered x tiles (f32)
                     + 2 * tile_b * pdims[-1] * out_itemsize     # double-buffered out tiles
                     + 4 * tile_b * max_d * 4)                   # in-kernel activation temporaries
        try:
            phys = int(pltpu.get_tpu_info().vmem_capacity_bytes)
        except Exception:
            phys = 64 << 20                                      # assume smallest (v7x-sized) VMEM
        cap = int(phys * 0.82)                                   # headroom for Mosaic scratch/sems
        return min(max(int(vmem_need * 1.3), 8 << 20), cap)

    kernel = functools.partial(_mlp_kernel, num_layers, tuple(pdims[1:]))

    def _build(single_buffer):
        return pl.pallas_call(
            kernel,
            grid=(nb,),
            in_specs=[x_spec] + _param_specs(single_buffer),
            out_specs=out_spec,
            out_shape=jax.ShapeDtypeStruct((b_pad, pdims[-1]), out_dtype),
            compiler_params=pltpu.CompilerParams(
                dimension_semantics=("parallel",),      # batch tiles shard across TCs on v7x
                vmem_limit_bytes=_vmem_limit(single_buffer),
            ),
            cost_estimate=cost,
        )

    # TODO(synk): when param_bytes exceeds the resident budget (~50 MiB on v7x / ~100 MiB on
    # v5e/v6e), switch to N-tiling the widest layer's output features (K kept resident) instead
    # of full weight residency, keeping the batch axis fully "parallel".
    try:
        out_padded = _build(single_buffer=True)(xp, *weights, b_packed)
    except Exception:
        # Fallback if this JAX build rejects single-buffered (Buffered(1)) resident operands.
        out_padded = _build(single_buffer=False)(xp, *weights, b_packed)

    return out_padded[:B, : dims[-1]]


def init_params(key, input_dim, num_hidden_layer, dim_hidden_layer, output_dim):
    """Deterministic init mirroring the layer structure of DeepQNet.__init__."""
    dims = [input_dim] + [dim_hidden_layer] * (num_hidden_layer + 1) + [output_dim]
    weights, biases = [], []
    for i in range(len(dims) - 1):
        d_in, d_out = dims[i], dims[i + 1]
        key, wk, bk = jax.random.split(key, 3)
        bound = 1.0 / jnp.sqrt(jnp.float32(d_in))  # same scale family as torch's default
        weights.append(jax.random.uniform(wk, (d_in, d_out), jnp.float32, -bound, bound))
        biases.append(jax.random.uniform(bk, (1, d_out), jnp.float32, -bound, bound))
    return weights, biases


def reference_forward_f32(x, weights, biases):
    h = x
    for i, (w, b) in enumerate(zip(weights, biases)):
        h = h @ w + b
        if i < len(weights) - 1:
            h = jnp.maximum(h, 0.0)
    return h


def reference_forward_bf16(x, weights, biases):
    # Same dtype policy as the kernel: bf16 operands, f32 accumulation / bias / ReLU.
    h = x.astype(jnp.bfloat16)
    for i, (w, b) in enumerate(zip(weights, biases)):
        h = jnp.dot(h, w.astype(jnp.bfloat16), preferred_element_type=jnp.float32)
        h = h + b.astype(jnp.float32)
        if i < len(weights) - 1:
            h = jnp.maximum(h, 0.0).astype(jnp.bfloat16)
    return h


if __name__ == "__main__":
    # Shapes consistent with DeepQNet(input_dim=16, num_hidden_layer=2,
    # dim_hidden_layer=32, output_dim=4); batch of 8 states.
    batch = 8
    input_dim = 16
    num_hidden_layer = 2
    dim_hidden_layer = 32
    output_dim = 4

    key = jax.random.PRNGKey(0)
    key, xk = jax.random.split(key)
    x = jax.random.normal(xk, (batch, input_dim), jnp.float32)

    weights, biases = init_params(key, input_dim, num_hidden_layer,
                                  dim_hidden_layer, output_dim)

    params = prepare_params(weights, biases)   # one-time pad/cast, reused across forward calls
    out = deep_q_net_forward(x, params)
    out = jax.block_until_ready(out)

    assert out.shape == (batch, output_dim)
    assert out.dtype == jnp.float32

    # Tight check vs a reference using the same bf16/f32 mixed-precision policy.
    ref_bf16 = reference_forward_bf16(x, weights, biases)
    assert jnp.allclose(out, ref_bf16, atol=2e-3, rtol=2e-3), \
        "Pallas output mismatch vs bf16-math reference"

    # Loose check vs the exact f32 PyTorch-equivalent forward (bf16 rounding only).
    ref_f32 = reference_forward_f32(x, weights, biases)
    assert jnp.allclose(out, ref_f32, atol=1e-1), \
        "Pallas output diverges from f32 reference beyond bf16 rounding"

    print("KERNEL_OK")
</pallas_src>

<mosaic_0001>
module attributes {stable_mosaic.version = 11 : i64} {
  func.func @_mlp_kernel(%arg0: i32, %arg1: memref<16x16xf32, #tpu.memory_space<vmem>>, %arg2: memref<16x128xbf16, #tpu.memory_space<vmem>>, %arg3: memref<128x128xbf16, #tpu.memory_space<vmem>>, %arg4: memref<128x128xbf16, #tpu.memory_space<vmem>>, %arg5: memref<128x128xbf16, #tpu.memory_space<vmem>>, %arg6: memref<4x128xf32, #tpu.memory_space<vmem>>, %arg7: memref<16x128xf32, #tpu.memory_space<vmem>>) attributes {dimension_semantics = [#tpu.dimension_semantics<parallel>], iteration_bounds = array<i64: 1>, scalar_prefetch = 0 : i64, scratch_operands = 0 : i64, tpu.core_type = #tpu.core_type<tc>, window_params = [{transform_indices = @transform_0, window_bounds = array<i64: 16, 16>}, {pipeline_mode = #tpu.pipeline_mode<synchronous>, transform_indices = @transform_1, window_bounds = array<i64: 16, 128>}, {pipeline_mode = #tpu.pipeline_mode<synchronous>, transform_indices = @transform_2, window_bounds = array<i64: 128, 128>}, {pipeline_mode = #tpu.pipeline_mode<synchronous>, transform_indices = @transform_3, window_bounds = array<i64: 128, 128>}, {pipeline_mode = #tpu.pipeline_mode<synchronous>, transform_indices = @transform_4, window_bounds = array<i64: 128, 128>}, {pipeline_mode = #tpu.pipeline_mode<synchronous>, transform_indices = @transform_5, window_bounds = array<i64: 4, 128>}, {transform_indices = @transform_6, window_bounds = array<i64: 16, 128>}]} {
    %c0 = arith.constant 0 : index
    %c0_0 = arith.constant 0 : index
    %0 = vector.load %arg1[%c0, %c0_0] : memref<16x16xf32, #tpu.memory_space<vmem>>, vector<16x16xf32>
    %1 = arith.truncf %0 : vector<16x16xf32> to vector<16x16xbf16>
    %c0_1 = arith.constant 0 : index
    %c0_2 = arith.constant 0 : index
    %2 = vector.load %arg2[%c0_1, %c0_2] : memref<16x128xbf16, #tpu.memory_space<vmem>>, vector<16x128xbf16>
    %cst = arith.constant dense<0.000000e+00> : vector<16x128xf32>
    %3 = tpu.matmul %1, %2, %cst {dimension_numbers = #tpu.dot_dimension_numbers<[1], [0], [0], [1], [0, 0, 1, 1], [], []>} : vector<16x16xbf16>, vector<16x128xbf16>, vector<16x128xf32> -> vector<16x128xf32>
    %c0_3 = arith.constant 0 : index
    %c0_4 = arith.constant 0 : index
    %4 = vector.load %arg6[%c0_3, %c0_4] : memref<4x128xf32, #tpu.memory_space<vmem>>, vector<1x128xf32>
    %5 = vector.broadcast %4 : vector<1x128xf32> to vector<16x128xf32>
    %6 = arith.addf %3, %5 : vector<16x128xf32>
    %cst_5 = arith.constant 0.000000e+00 : f32
    %7 = vector.broadcast %cst_5 : f32 to vector<16x128xf32>
    %8 = arith.maximumf %6, %7 : vector<16x128xf32>
    %9 = arith.truncf %8 : vector<16x128xf32> to vector<16x128xbf16>
    %c0_6 = arith.constant 0 : index
    %c0_7 = arith.constant 0 : index
    %10 = vector.load %arg3[%c0_6, %c0_7] : memref<128x128xbf16, #tpu.memory_space<vmem>>, vector<128x128xbf16>
    %cst_8 = arith.constant dense<0.000000e+00> : vector<16x128xf32>
    %11 = tpu.matmul %9, %10, %cst_8 {dimension_numbers = #tpu.dot_dimension_numbers<[1], [0], [0], [1], [0, 0, 1, 1], [], []>} : vector<16x128xbf16>, vector<128x128xbf16>, vector<16x128xf32> -> vector<16x128xf32>
    %c1 = arith.constant 1 : index
    %c0_9 = arith.constant 0 : index
    %12 = vector.load %arg6[%c1, %c0_9] : memref<4x128xf32, #tpu.memory_space<vmem>>, vector<1x128xf32>
    %13 = vector.broadcast %12 : vector<1x128xf32> to vector<16x128xf32>
    %14 = arith.addf %11, %13 : vector<16x128xf32>
    %cst_10 = arith.constant 0.000000e+00 : f32
    %15 = vector.broadcast %cst_10 : f32 to vector<16x128xf32>
    %16 = arith.maximumf %14, %15 : vector<16x128xf32>
    %17 = arith.truncf %16 : vector<16x128xf32> to vector<16x128xbf16>
    %c0_11 = arith.constant 0 : index
    %c0_12 = arith.constant 0 : index
    %18 = vector.load %arg4[%c0_11, %c0_12] : memref<128x128xbf16, #tpu.memory_space<vmem>>, vector<128x128xbf16>
    %cst_13 = arith.constant dense<0.000000e+00> : vector<16x128xf32>
    %19 = tpu.matmul %17, %18, %cst_13 {dimension_numbers = #tpu.dot_dimension_numbers<[1], [0], [0], [1], [0, 0, 1, 1], [], []>} : vector<16x128xbf16>, vector<128x128xbf16>, vector<16x128xf32> -> vector<16x128xf32>
    %c2 = arith.constant 2 : index
    %c0_14 = arith.constant 0 : index
    %20 = vector.load %arg6[%c2, %c0_14] : memref<4x128xf32, #tpu.memory_space<vmem>>, vector<1x128xf32>
    %21 = vector.broadcast %20 : vector<1x128xf32> to vector<16x128xf32>
    %22 = arith.addf %19, %21 : vector<16x128xf32>
    %cst_15 = arith.constant 0.000000e+00 : f32
    %23 = vector.broadcast %cst_15 : f32 to vector<16x128xf32>
    %24 = arith.maximumf %22, %23 : vector<16x128xf32>
    %25 = arith.truncf %24 : vector<16x128xf32> to vector<16x128xbf16>
    %c0_16 = arith.constant 0 : index
    %c0_17 = arith.constant 0 : index
    %26 = vector.load %arg5[%c0_16, %c0_17] : memref<128x128xbf16, #tpu.memory_space<vmem>>, vector<128x128xbf16>
    %cst_18 = arith.constant dense<0.000000e+00> : vector<16x128xf32>
    %27 = tpu.matmul %25, %26, %cst_18 {dimension_numbers = #tpu.dot_dimension_numbers<[1], [0], [0], [1], [0, 0, 1, 1], [], []>} : vector<16x128xbf16>, vector<128x128xbf16>, vector<16x128xf32> -> vector<16x128xf32>
    %c3 = arith.constant 3 : index
    %c0_19 = arith.constant 0 : index
    %28 = vector.load %arg6[%c3, %c0_19] : memref<4x128xf32, #tpu.memory_space<vmem>>, vector<1x128xf32>
    %29 = vector.broadcast %28 : vector<1x128xf32> to vector<16x128xf32>
    %30 = arith.addf %27, %29 : vector<16x128xf32>
    %c0_20 = arith.constant 0 : index
    %c0_21 = arith.constant 0 : index
    %31 = vector.load %arg7[%c0_20, %c0_21] : memref<16x128xf32, #tpu.memory_space<vmem>>, vector<16x128xf32>
    tpu.vector_store %arg7[%c0_20, %c0_21], %30 {strides = array<i32>} : memref<16x128xf32, #tpu.memory_space<vmem>>, vector<16x128xf32>,
    return
  }
  func.func @transform_0(%arg0: i32) -> (i32, i32) {
    %c0_i32 = arith.constant 0 : i32
    %c0_i32_0 = arith.constant 0 : i32
    return %arg0, %c0_i32 : i32, i32
  }
  func.func @transform_1(%arg0: i32) -> (i32, i32) {
    %c0_i32 = arith.constant 0 : i32
    %c0_i32_0 = arith.constant 0 : i32
    %c0_i32_1 = arith.constant 0 : i32
    return %c0_i32, %c0_i32_0 : i32, i32
  }
  func.func @transform_2(%arg0: i32) -> (i32, i32) {
    %c0_i32 = arith.constant 0 : i32
    %c0_i32_0 = arith.constant 0 : i32
    %c0_i32_1 = arith.constant 0 : i32
    return %c0_i32, %c0_i32_0 : i32, i32
  }
  func.func @transform_3(%arg0: i32) -> (i32, i32) {
    %c0_i32 = arith.constant 0 : i32
    %c0_i32_0 = arith.constant 0 : i32
    %c0_i32_1 = arith.constant 0 : i32
    return %c0_i32, %c0_i32_0 : i32, i32
  }
  func.func @transform_4(%arg0: i32) -> (i32, i32) {
    %c0_i32 = arith.constant 0 : i32
    %c0_i32_0 = arith.constant 0 : i32
    %c0_i32_1 = arith.constant 0 : i32
    return %c0_i32, %c0_i32_0 : i32, i32
  }
  func.func @transform_5(%arg0: i32) -> (i32, i32) {
    %c0_i32 = arith.constant 0 : i32
    %c0_i32_0 = arith.constant 0 : i32
    %c0_i32_1 = arith.constant 0 : i32
    return %c0_i32, %c0_i32_0 : i32, i32
  }
  func.func @transform_6(%arg0: i32) -> (i32, i32) {
    %c0_i32 = arith.constant 0 : i32
    %c0_i32_0 = arith.constant 0 : i32
    return %arg0, %c0_i32 : i32, i32
  }
}

module attributes {stable_mosaic.version = 11 : i64} {
  func.func @_mlp_kernel(%arg0: i32, %arg1: memref<16x16xf32, #tpu.memory_space<vmem>>, %arg2: memref<16x128xbf16, #tpu.memory_space<vmem>>, %arg3: memref<128x128xbf16, #tpu.memory_space<vmem>>, %arg4: memref<128x128xbf16, #tpu.memory_space<vmem>>, %arg5: memref<128x128xbf16, #tpu.memory_space<vmem>>, %arg6: memref<4x128xf32, #tpu.memory_space<vmem>>, %arg7: memref<16x128xf32, #tpu.memory_space<vmem>>) attributes {dimension_semantics = [#tpu.dimension_semantics<parallel>], iteration_bounds = array<i64: 1>, scalar_prefetch = 0 : i64, scratch_operands = 0 : i64, tpu.core_type = #tpu.core_type<tc>, window_params = [{transform_indices = @transform_0, window_bounds = array<i64: 16, 16>}, {pipeline_mode = #tpu.pipeline_mode<synchronous>, transform_indices = @transform_1, window_bounds = array<i64: 16, 128>}, {pipeline_mode = #tpu.pipeline_mode<synchronous>, transform_indices = @transform_2, window_bounds = array<i64: 128, 128>}, {pipeline_mode = #tpu.pipeline_mode<synchronous>, transform_indices = @transform_3, window_bounds = array<i64: 128, 128>}, {pipeline_mode = #tpu.pipeline_mode<synchronous>, transform_indices = @transform_4, window_bounds = array<i64: 128, 128>}, {pipeline_mode = #tpu.pipeline_mode<synchronous>, transform_indices = @transform_5, window_bounds = array<i64: 4, 128>}, {transform_indices = @transform_6, window_bounds = array<i64: 16, 128>}]} {
    %c0 = arith.constant 0 : index
    %c0_0 = arith.constant 0 : index
    %0 = vector.load %arg1[%c0, %c0_0] : memref<16x16xf32, #tpu.memory_space<vmem>>, vector<16x16xf32>
    %1 = arith.truncf %0 : vector<16x16xf32> to vector<16x16xbf16>
    %c0_1 = arith.constant 0 : index
    %c0_2 = arith.constant 0 : index
    %2 = vector.load %arg2[%c0_1, %c0_2] : memref<16x128xbf16, #tpu.memory_space<vmem>>, vector<16x128xbf16>
    %cst = arith.constant dense<0.000000e+00> : vector<16x128xf32>
    %3 = tpu.matmul %1, %2, %cst {dimension_numbers = #tpu.dot_dimension_numbers<[1], [0], [0], [1], [0, 0, 1, 1], [], []>} : vector<16x16xbf16>, vector<16x128xbf16>, vector<16x128xf32> -> vector<16x128xf32>
    %c0_3 = arith.constant 0 : index
    %c0_4 = arith.constant 0 : index
    %4 = vector.load %arg6[%c0_3, %c0_4] : memref<4x128xf32, #tpu.memory_space<vmem>>, vector<1x128xf32>
    %5 = vector.broadcast %4 : vector<1x128xf32> to vector<16x128xf32>
    %6 = arith.addf %3, %5 : vector<16x128xf32>
    %cst_5 = arith.constant 0.000000e+00 : f32
    %7 = vector.broadcast %cst_5 : f32 to vector<16x128xf32>
    %8 = arith.maximumf %6, %7 : vector<16x128xf32>
    %9 = arith.truncf %8 : vector<16x128xf32> to vector<16x128xbf16>
    %c0_6 = arith.constant 0 : index
    %c0_7 = arith.constant 0 : index
    %10 = vector.load %arg3[%c0_6, %c0_7] : memref<128x128xbf16, #tpu.memory_space<vmem>>, vector<128x128xbf16>
    %cst_8 = arith.constant dense<0.000000e+00> : vector<16x128xf32>
    %11 = tpu.matmul %9, %10, %cst_8 {dimension_numbers = #tpu.dot_dimension_numbers<[1], [0], [0], [1], [0, 0, 1, 1], [], []>} : vector<16x128xbf16>, vector<128x128xbf16>, vector<16x128xf32> -> vector<16x128xf32>
    %c1 = arith.constant 1 : index
    %c0_9 = arith.constant 0 : index
    %12 = vector.load %arg6[%c1, %c0_9] : memref<4x128xf32, #tpu.memory_space<vmem>>, vector<1x128xf32>
    %13 = vector.broadcast %12 : vector<1x128xf32> to vector<16x128xf32>
    %14 = arith.addf %11, %13 : vector<16x128xf32>
    %cst_10 = arith.constant 0.000000e+00 : f32
    %15 = vector.broadcast %cst_10 : f32 to vector<16x128xf32>
    %16 = arith.maximumf %14, %15 : vector<16x128xf32>
    %17 = arith.truncf %16 : vector<16x128xf32> to vector<16x128xbf16>
    %c0_11 = arith.constant 0 : index
    %c0_12 = arith.constant 0 : index
    %18 = vector.load %arg4[%c0_11, %c0_12] : memref<128x128xbf16, #tpu.memory_space<vmem>>, vector<128x128xbf16>
    %cst_13 = arith.constant dense<0.000000e+00> : vector<16x128xf32>
    %19 = tpu.matmul %17, %18, %cst_13 {dimension_numbers = #tpu.dot_dimension_numbers<[1], [0], [0], [1], [0, 0, 1, 1], [], []>} : vector<16x128xbf16>, vector<128x128xbf16>, vector<16x128xf32> -> vector<16x128xf32>
    %c2 = arith.constant 2 : index
    %c0_14 = arith.constant 0 : index
    %20 = vector.load %arg6[%c2, %c0_14] : memref<4x128xf32, #tpu.memory_space<vmem>>, vector<1x128xf32>
    %21 = vector.broadcast %20 : vector<1x128xf32> to vector<16x128xf32>
    %22 = arith.addf %19, %21 : vector<16x128xf32>
    %cst_15 = arith.constant 0.000000e+00 : f32
    %23 = vector.broadcast %cst_15 : f32 to vector<16x128xf32>
    %24 = arith.maximumf %22, %23 : vector<16x128xf32>
    %25 = arith.truncf %24 : vector<16x128xf32> to vector<16x128xbf16>
    %c0_16 = arith.constant 0 : index
    %c0_17 = arith.constant 0 : index
    %26 = vector.load %arg5[%c0_16, %c0_17] : memref<128x128xbf16, #tpu.memory_space<vmem>>, vector<128x128xbf16>
    %cst_18 = arith.constant dense<0.000000e+00> : vector<16x128xf32>
    %27 = tpu.matmul %25, %26, %cst_18 {dimension_numbers = #tpu.dot_dimension_numbers<[1], [0], [0], [1], [0, 0, 1, 1], [], []>} : vector<16x128xbf16>, vector<128x128xbf16>, vector<16x128xf32> -> vector<16x128xf32>
    %c3 = arith.constant 3 : index
    %c0_19 = arith.constant 0 : index
    %28 = vector.load %arg6[%c3, %c0_19] : memref<4x128xf32, #tpu.memory_space<vmem>>, vector<1x128xf32>
    %29 = vector.broadcast %28 : vector<1x128xf32> to vector<16x128xf32>
    %30 = arith.addf %27, %29 : vector<16x128xf32>
    %c0_20 = arith.constant 0 : index
    %c0_21 = arith.constant 0 : index
    %31 = vector.load %arg7[%c0_20, %c0_21] : memref<16x128xf32, #tpu.memory_space<vmem>>, vector<16x128xf32>
    tpu.vector_store %arg7[%c0_20, %c0_21], %30 {strides = array<i32>} : memref<16x128xf32, #tpu.memory_space<vmem>>, vector<16x128xf32>,
    return
  }
  func.func @transform_0(%arg0: i32) -> (i32, i32) {
    %c0_i32 = arith.constant 0 : i32
    %c0_i32_0 = arith.constant 0 : i32
    return %arg0, %c0_i32 : i32, i32
  }
  func.func @transform_1(%arg0: i32) -> (i32, i32) {
    %c0_i32 = arith.constant 0 : i32
    %c0_i32_0 = arith.constant 0 : i32
    %c0_i32_1 = arith.constant 0 : i32
    return %c0_i32, %c0_i32_0 : i32, i32
  }
  func.func @transform_2(%arg0: i32) -> (i32, i32) {
    %c0_i32 = arith.constant 0 : i32
    %c0_i32_0 = arith.constant 0 : i32
    %c0_i32_1 = arith.constant 0 : i32
    return %c0_i32, %c0_i32_0 : i32, i32
  }
  func.func @transform_3(%arg0: i32) -> (i32, i32) {
    %c0_i32 = arith.constant 0 : i32
    %c0_i32_0 = arith.constant 0 : i32
    %c0_i32_1 = arith.constant 0 : i32
    return %c0_i32, %c0_i32_0 : i32, i32
  }
  func.func @transform_4(%arg0: i32) -> (i32, i32) {
    %c0_i32 = arith.constant 0 : i32
    %c0_i32_0 = arith.constant 0 : i32
    %c0_i32_1 = arith.constant 0 : i32
    return %c0_i32, %c0_i32_0 : i32, i32
  }
  func.func @transform_5(%arg0: i32) -> (i32, i32) {
    %c0_i32 = arith.constant 0 : i32
    %c0_i32_0 = arith.constant 0 : i32
    %c0_i32_1 = arith.constant 0 : i32
    return %c0_i32, %c0_i32_0 : i32, i32
  }
  func.func @transform_6(%arg0: i32) -> (i32, i32) {
    %c0_i32 = arith.constant 0 : i32
    %c0_i32_0 = arith.constant 0 : i32
    return %arg0, %c0_i32 : i32, i32
  }
}

</mosaic_0001>

<llo_original>
// kernel: tpu_custom_call.1
$region0: #{tpu_custom_call.1}
  #allocation0 [shape = 'u32[]', space=smem, size = 0x4, offset = 0x4, fixed_abs, tag = 'smem constant byte address 0x4 - core index']
  #allocation1 [shape = 'u32[72,128]{1,0:T(1,128)}', space=vmem, size = 0x9000, scoped, tag = 'internal scratch']
  %s0 = inlined_call_operand.hbm [shape: f32[16,16], index: 0, kind: input, shape index: {}]
  %s1 = inlined_call_operand.hbm [shape: bf16[16,128], index: 1, kind: input, shape index: {}]
  %s2 = inlined_call_operand.hbm [shape: bf16[128,128], index: 2, kind: input, shape index: {}]
  %s3 = inlined_call_operand.hbm [shape: bf16[128,128], index: 3, kind: input, shape index: {}]
  %s4 = inlined_call_operand.hbm [shape: bf16[128,128], index: 4, kind: input, shape index: {}]
  %s5 = inlined_call_operand.vmem [shape: f32[4,128], index: 5, kind: input, shape index: {}]
  %s6 = inlined_call_operand.hbm [shape: f32[16,128], index: 6, kind: output, shape index: {}]
  %s7 = sld [smem:[#allocation0]]
  $region54: #{tpu_custom_call.1} parent=0
    _
  %s9 = ssub.s32 1, %s7
  %s10 = scalar_select 0, %s9, %s7
  $region1: #{tpu_custom_call.1} parent=0
    #allocation2 [shape = 'u8[8192]{0}', space=vmem, size = 0x2000, scoped, tag = 'input window, operand 0, single buffered']
    #allocation3 [shape = 's32[1]{0}', space=sflag, size = 0x4, scoped, tag = 'scoped memory for tpu_custom_call.1']
    #allocation4 [shape = 's32[1]{0}', space=sflag, size = 0x4, scoped, tag = 'scoped memory for tpu_custom_call.1']
    #allocation5 [shape = 'u8[4096]{0}', space=vmem, size = 0x1000, scoped, tag = 'input window, operand 1, single buffered']
    #allocation6 [shape = 's32[1]{0}', space=sflag, size = 0x4, scoped, tag = 'scoped memory for tpu_custom_call.1']
    #allocation7 [shape = 'u8[32768]{0}', space=vmem, size = 0x8000, scoped, tag = 'input window, operand 2, single buffered']
    #allocation8 [shape = 'u8[32768]{0}', space=vmem, size = 0x8000, scoped, tag = 'input window, operand 3, single buffered']
    #allocation9 [shape = 's32[1]{0}', space=sflag, size = 0x4, scoped, tag = 'scoped memory for tpu_custom_call.1']
    #allocation10 [shape = 'u8[32768]{0}', space=vmem, size = 0x8000, scoped, tag = 'input window, operand 4, single buffered']
    #allocation11 [shape = 'u8[8192]{0}', space=vmem, size = 0x2000, scoped, tag = 'output window, operand 0, single buffered']
    %11 = vsyncpa [#allocation3], 0
    %12 = vsyncpa [#allocation6], 0
    %13 = vsyncpa [#allocation9], 0
    %14 = vsyncpa [#allocation4], 0
    // Predicated region
    $region2: #{tpu_custom_call.1} parent=1 // pred_check
      _
    $region3: #{tpu_custom_call.1} parent=1 // pred_check_branch
      %16 = sbr.rel (0) target = $region5
    $region4: #{tpu_custom_call.1} parent=1 // pred_region
      %18 = vsyncadd [#allocation3], 0
      %s19 = sshll.u32 %s0, 4
      %s20 = int_to_ptr.hbm [resolvable:$true] %s19
      %s21 = sshll.u32 [#allocation2], 4
      %s22 = int_to_ptr.vmem [resolvable:$true] %s21
      %27 = dma.hbm_to_vmem [thread:$0]  %s20, 256, %s22, [#allocation3], 128, 128, 8
    $region5: #{tpu_custom_call.1} parent=1 // pred_fallthru
      _
    // Predicated region
    $region6: #{tpu_custom_call.1} parent=1 // pred_check
      _
    $region7: #{tpu_custom_call.1} parent=1 // pred_check_branch
      %29 = sbr.rel (0) target = $region9
    $region8: #{tpu_custom_call.1} parent=1 // pred_region
      %31 = vsyncadd [#allocation6], 0
      %s32 = sshll.u32 %s1, 4
      %s33 = int_to_ptr.hbm [resolvable:$true] %s32
      %s34 = sshll.u32 [#allocation5], 4
      %s35 = int_to_ptr.vmem [resolvable:$true] %s34
      %40 = dma.hbm_to_vmem [thread:$0]  %s33, 128, %s35, [#allocation6], 64, 64, 4
    $region9: #{tpu_custom_call.1} parent=1 // pred_fallthru
      _
    // Predicated region
    $region10: #{tpu_custom_call.1} parent=1 // pred_check
      _
    $region11: #{tpu_custom_call.1} parent=1 // pred_check_branch
      %42 = sbr.rel (0) target = $region13
    $region12: #{tpu_custom_call.1} parent=1 // pred_region
      %44 = vsyncadd [#allocation6], 0
      %s45 = sshll.u32 %s2, 4
      %s46 = int_to_ptr.hbm [resolvable:$true] %s45
      %s47 = sshll.u32 [#allocation7], 4
      %s48 = int_to_ptr.vmem [resolvable:$true] %s47
      %53 = dma.hbm_to_vmem [thread:$0]  %s46, 1024, %s48, [#allocation6], 64, 64, 4
    $region13: #{tpu_custom_call.1} parent=1 // pred_fallthru
      _
    // Predicated region
    $region14: #{tpu_custom_call.1} parent=1 // pred_check
      _
    $region15: #{tpu_custom_call.1} parent=1 // pred_check_branch
      %55 = sbr.rel (0) target = $region17
    $region16: #{tpu_custom_call.1} parent=1 // pred_region
      %57 = vsyncadd [#allocation9], 0
      %s58 = sshll.u32 %s3, 4
      %s59 = int_to_ptr.hbm [resolvable:$true] %s58
      %s60 = sshll.u32 [#allocation8], 4
      %s61 = int_to_ptr.vmem [resolvable:$true] %s60
      %66 = dma.hbm_to_vmem [thread:$0]  %s59, 1024, %s61, [#allocation9], 64, 64, 4
    $region17: #{tpu_custom_call.1} parent=1 // pred_fallthru
      _
    // Predicated region
    $region18: #{tpu_custom_call.1} parent=1 // pred_check
      _
    $region19: #{tpu_custom_call.1} parent=1 // pred_check_branch
      %68 = sbr.rel (0) target = $region21
    $region20: #{tpu_custom_call.1} parent=1 // pred_region
      %70 = vsyncadd [#allocation9], 0
      %s71 = sshll.u32 %s4, 4
      %s72 = int_to_ptr.hbm [resolvable:$true] %s71
      %s73 = sshll.u32 [#allocation10], 4
      %s74 = int_to_ptr.vmem [resolvable:$true] %s73
      %79 = dma.hbm_to_vmem [thread:$0]  %s72, 1024, %s74, [#allocation9], 64, 64, 4
    $region21: #{tpu_custom_call.1} parent=1 // pred_fallthru
      _
    // Predicated region
    $region22: #{tpu_custom_call.1} parent=1 // pred_check
      _
    $region23: #{tpu_custom_call.1} parent=1 // pred_check_branch
      %81 = sbr.rel (0) target = $region25
    $region24: #{tpu_custom_call.1} parent=1 // pred_region
      _
    $region25: #{tpu_custom_call.1} parent=1 // pred_fallthru
      _
    // Predicated region
    $region26: #{tpu_custom_call.1} parent=1 // pred_check
      _
    $region27: #{tpu_custom_call.1} parent=1 // pred_check_branch
      %83 = sbr.rel (0) target = $region29
    $region28: #{tpu_custom_call.1} parent=1 // pred_region
      %85 = dma.done [#allocation3], 256
    $region29: #{tpu_custom_call.1} parent=1 // pred_fallthru
      _
    // Predicated region
    $region30: #{tpu_custom_call.1} parent=1 // pred_check
      _
    $region31: #{tpu_custom_call.1} parent=1 // pred_check_branch
      %87 = sbr.rel (0) target = $region33
    $region32: #{tpu_custom_call.1} parent=1 // pred_region
      %89 = dma.done [#allocation6], 128
    $region33: #{tpu_custom_call.1} parent=1 // pred_fallthru
      _
    // Predicated region
    $region34: #{tpu_custom_call.1} parent=1 // pred_check
      _
    $region35: #{tpu_custom_call.1} parent=1 // pred_check_branch
      %91 = sbr.rel (0) target = $region37
    $region36: #{tpu_custom_call.1} parent=1 // pred_region
      %93 = dma.done [#allocation6], 1024
    $region37: #{tpu_custom_call.1} parent=1 // pred_fallthru
      _
    // Predicated region
    $region38: #{tpu_custom_call.1} parent=1 // pred_check
      _
    $region39: #{tpu_custom_call.1} parent=1 // pred_check_branch
      %95 = sbr.rel (0) target = $region41
    $region40: #{tpu_custom_call.1} parent=1 // pred_region
      %97 = dma.done [#allocation9], 1024
    $region41: #{tpu_custom_call.1} parent=1 // pred_fallthru
      _
    // Predicated region
    $region42: #{tpu_custom_call.1} parent=1 // pred_check
      _
    $region43: #{tpu_custom_call.1} parent=1 // pred_check_branch
      %99 = sbr.rel (0) target = $region45
    $region44: #{tpu_custom_call.1} parent=1 // pred_region
      %101 = dma.done [#allocation9], 1024
    $region45: #{tpu_custom_call.1} parent=1 // pred_fallthru
      _
    %v103 = vld [vmem:[#allocation2] sm:$0xff]
    %v104 = vld [vmem:[#allocation2 + $0x8] sm:$0xff]
    %v105 = vpack.c.bf16 %v104, %v103
    %v106 = vld [vmem:[#allocation5] sm:$0xf]
    %v107 = vld [vmem:[#allocation5 + $0x4] sm:$0xf]
    %v108 = vld [vmem:[%s5] sm:$0x1]
    %v109 = vperm.slane %v108, 0
    %v112 = vunpack.c.l.b16 %v106
    %v113 = vunpack.c.l.b16 %v107
    %v114 = vpack.c.b16 %v113, %v112
    %vm116 = vcmask 130048
    %v118 = vsel %vm116, %v105, 0
    %120 = vmatpush.bf16.msra.mxu0 0
    %121 = vmatpush.bf16.msra.mxu0 0
    %122 = vmatpush.bf16.msra.mxu0 0
    %123 = vmatpush.bf16.msra.mxu0 0
    %124 = vmatpush.bf16.msra.mxu0 0
    %125 = vmatpush.bf16.msra.mxu0 0
    %126 = vmatpush.bf16.msra.mxu0 0
    %127 = vmatpush.bf16.msra.mxu0 %v114
    %128 = vmatmul.bf16.gmra.mxu0 %v118
    %v129 = vpop.f32.mrf.mxu0
    %v130 = vadd.f32 %v109, %v129
    %v131 = vpop.f32.mrf.mxu0
    %v132 = vadd.f32 %v109, %v131
    %133 = vdwg.mxu0
    %v134 = vmax.f32 %v130, 0.0
    %v135 = vmax.f32 %v132, 0.0
    %v136 = vpack.c.bf16 %v135, %v134
    %v137 = vld [vmem:[#allocation7] sm:$0xf]
    %v138 = vld [vmem:[#allocation7 + $0x4] sm:$0xf]
    %v139 = vld [vmem:[#allocation7 + $0x8] sm:$0xf]
    %v140 = vld [vmem:[#allocation7 + $0xc] sm:$0xf]
    %v141 = vld [vmem:[#allocation7 + $0x10] sm:$0xf]
    %v142 = vld [vmem:[#allocation7 + $0x14] sm:$0xf]
    %v143 = vld [vmem:[#allocation7 + $0x18] sm:$0xf]
    %v144 = vld [vmem:[#allocation7 + $0x1c] sm:$0xf]
    %v145 = vld [vmem:[#allocation7 + $0x20] sm:$0xf]
    %v146 = vld [vmem:[#allocation7 + $0x24] sm:$0xf]
    %v147 = vld [vmem:[#allocation7 + $0x28] sm:$0xf]
    %v148 = vld [vmem:[#allocation7 + $0x2c] sm:$0xf]
    %v149 = vld [vmem:[#allocation7 + $0x30] sm:$0xf]
    %v150 = vld [vmem:[#allocation7 + $0x34] sm:$0xf]
    %v151 = vld [vmem:[#allocation7 + $0x38] sm:$0xf]
    %v152 = vld [vmem:[#allocation7 + $0x3c] sm:$0xf]
    %v153 = vld [vmem:[%s5 + $0x1] sm:$0x1]
    %v154 = vperm.slane %v153, 0
    %v171 = vunpack.c.l.b16 %v137
    %v172 = vunpack.c.l.b16 %v138
    %v173 = vunpack.c.l.b16 %v139
    %v174 = vunpack.c.l.b16 %v140
    %v175 = vunpack.c.l.b16 %v141
    %v176 = vunpack.c.l.b16 %v142
    %v177 = vunpack.c.l.b16 %v143
    %v178 = vunpack.c.l.b16 %v144
    %v179 = vunpack.c.l.b16 %v145
    %v180 = vunpack.c.l.b16 %v146
    %v181 = vunpack.c.l.b16 %v147
    %v182 = vunpack.c.l.b16 %v148
    %v183 = vunpack.c.l.b16 %v149
    %v184 = vunpack.c.l.b16 %v150
    %v185 = vunpack.c.l.b16 %v151
    %v186 = vunpack.c.l.b16 %v152
    %v187 = vpack.c.b16 %v172, %v171
    %v188 = vpack.c.b16 %v174, %v173
    %v189 = vpack.c.b16 %v176, %v175
    %v190 = vpack.c.b16 %v178, %v177
    %v191 = vpack.c.b16 %v180, %v179
    %v192 = vpack.c.b16 %v182, %v181
    %v193 = vpack.c.b16 %v184, %v183
    %v194 = vpack.c.b16 %v186, %v185
    %203 = vmatpush.bf16.msra.mxu0 %v194
    %204 = vmatpush.bf16.msra.mxu0 %v193
    %205 = vmatpush.bf16.msra.mxu0 %v192
    %206 = vmatpush.bf16.msra.mxu0 %v191
    %207 = vmatpush.bf16.msra.mxu0 %v190
    %208 = vmatpush.bf16.msra.mxu0 %v189
    %209 = vmatpush.bf16.msra.mxu0 %v188
    %210 = vmatpush.bf16.msra.mxu0 %v187
    %211 = vmatmul.bf16.gmra.mxu0 %v136
    %v212 = vpop.f32.mrf.mxu0
    %v213 = vadd.f32 %v154, %v212
    %v214 = vpop.f32.mrf.mxu0
    %v215 = vadd.f32 %v154, %v214
    %216 = vdwg.mxu0
    %v217 = vmax.f32 %v213, 0.0
    %v218 = vmax.f32 %v215, 0.0
    %v219 = vpack.c.bf16 %v218, %v217
    %v220 = vld [vmem:[#allocation8] sm:$0xf]
    %v221 = vld [vmem:[#allocation8 + $0x4] sm:$0xf]
    %v222 = vld [vmem:[#allocation8 + $0x8] sm:$0xf]
    %v223 = vld [vmem:[#allocation8 + $0xc] sm:$0xf]
    %v224 = vld [vmem:[#allocation8 + $0x10] sm:$0xf]
    %v225 = vld [vmem:[#allocation8 + $0x14] sm:$0xf]
    %v226 = vld [vmem:[#allocation8 + $0x18] sm:$0xf]
    %v227 = vld [vmem:[#allocation8 + $0x1c] sm:$0xf]
    %v228 = vld [vmem:[#allocation8 + $0x20] sm:$0xf]
    %v229 = vld [vmem:[#allocation8 + $0x24] sm:$0xf]
    %v230 = vld [vmem:[#allocation8 + $0x28] sm:$0xf]
    %v231 = vld [vmem:[#allocation8 + $0x2c] sm:$0xf]
    %v232 = vld [vmem:[#allocation8 + $0x30] sm:$0xf]
    %v233 = vld [vmem:[#allocation8 + $0x34] sm:$0xf]
    %v234 = vld [vmem:[#allocation8 + $0x38] sm:$0xf]
    %v235 = vld [vmem:[#allocation8 + $0x3c] sm:$0xf]
    %v236 = vld [vmem:[%s5 + $0x2] sm:$0x1]
    %v237 = vperm.slane %v236, 0
    %v254 = vunpack.c.l.b16 %v220
    %v255 = vunpack.c.l.b16 %v221
    %v256 = vunpack.c.l.b16 %v222
    %v257 = vunpack.c.l.b16 %v223
    %v258 = vunpack.c.l.b16 %v224
    %v259 = vunpack.c.l.b16 %v225
    %v260 = vunpack.c.l.b16 %v226
    %v261 = vunpack.c.l.b16 %v227
    %v262 = vunpack.c.l.b16 %v228
    %v263 = vunpack.c.l.b16 %v229
    %v264 = vunpack.c.l.b16 %v230
    %v265 = vunpack.c.l.b16 %v231
    %v266 = vunpack.c.l.b16 %v232
    %v267 = vunpack.c.l.b16 %v233
    %v268 = vunpack.c.l.b16 %v234
    %v269 = vunpack.c.l.b16 %v235
    %v270 = vpack.c.b16 %v255, %v254
    %v271 = vpack.c.b16 %v257, %v256
    %v272 = vpack.c.b16 %v259, %v258
    %v273 = vpack.c.b16 %v261, %v260
    %v274 = vpack.c.b16 %v263, %v262
    %v275 = vpack.c.b16 %v265, %v264
    %v276 = vpack.c.b16 %v267, %v266
    %v277 = vpack.c.b16 %v269, %v268
    %286 = vmatpush.bf16.msra.mxu0 %v277
    %287 = vmatpush.bf16.msra.mxu0 %v276
    %288 = vmatpush.bf16.msra.mxu0 %v275
    %289 = vmatpush.bf16.msra.mxu0 %v274
    %290 = vmatpush.bf16.msra.mxu0 %v273
    %291 = vmatpush.bf16.msra.mxu0 %v272
    %292 = vmatpush.bf16.msra.mxu0 %v271
    %293 = vmatpush.bf16.msra.mxu0 %v270
    %294 = vmatmul.bf16.gmra.mxu0 %v219
    %v295 = vpop.f32.mrf.mxu0
    %v296 = vadd.f32 %v237, %v295
    %v297 = vpop.f32.mrf.mxu0
    %v298 = vadd.f32 %v237, %v297
    %299 = vdwg.mxu0
    %v300 = vmax.f32 %v296, 0.0
    %v301 = vmax.f32 %v298, 0.0
    %v302 = vpack.c.bf16 %v301, %v300
    %v303 = vld [vmem:[#allocation10] sm:$0xf]
    %v304 = vld [vmem:[#allocation10 + $0x4] sm:$0xf]
    %v305 = vld [vmem:[#allocation10 + $0x8] sm:$0xf]
    %v306 = vld [vmem:[#allocation10 + $0xc] sm:$0xf]
    %v307 = vld [vmem:[#allocation10 + $0x10] sm:$0xf]
    %v308 = vld [vmem:[#allocation10 + $0x14] sm:$0xf]
    %v309 = vld [vmem:[#allocation10 + $0x18] sm:$0xf]
    %v310 = vld [vmem:[#allocation10 + $0x1c] sm:$0xf]
    %v311 = vld [vmem:[#allocation10 + $0x20] sm:$0xf]
    %v312 = vld [vmem:[#allocation10 + $0x24] sm:$0xf]
    %v313 = vld [vmem:[#allocation10 + $0x28] sm:$0xf]
    %v314 = vld [vmem:[#allocation10 + $0x2c] sm:$0xf]
    %v315 = vld [vmem:[#allocation10 + $0x30] sm:$0xf]
    %v316 = vld [vmem:[#allocation10 + $0x34] sm:$0xf]
    %v317 = vld [vmem:[#allocation10 + $0x38] sm:$0xf]
    %v318 = vld [vmem:[#allocation10 + $0x3c] sm:$0xf]
    %v319 = vld [vmem:[%s5 + $0x3] sm:$0x1]
    %v320 = vperm.slane %v319, 0
    %v337 = vunpack.c.l.b16 %v303
    %v338 = vunpack.c.l.b16 %v304
    %v339 = vunpack.c.l.b16 %v305
    %v340 = vunpack.c.l.b16 %v306
    %v341 = vunpack.c.l.b16 %v307
    %v342 = vunpack.c.l.b16 %v308
    %v343 = vunpack.c.l.b16 %v309
    %v344 = vunpack.c.l.b16 %v310
    %v345 = vunpack.c.l.b16 %v311
    %v346 = vunpack.c.l.b16 %v312
    %v347 = vunpack.c.l.b16 %v313
    %v348 = vunpack.c.l.b16 %v314
    %v349 = vunpack.c.l.b16 %v315
    %v350 = vunpack.c.l.b16 %v316
    %v351 = vunpack.c.l.b16 %v317
    %v352 = vunpack.c.l.b16 %v318
    %v353 = vpack.c.b16 %v338, %v337
    %v354 = vpack.c.b16 %v340, %v339
    %v355 = vpack.c.b16 %v342, %v341
    %v356 = vpack.c.b16 %v344, %v343
    %v357 = vpack.c.b16 %v346, %v345
    %v358 = vpack.c.b16 %v348, %v347
    %v359 = vpack.c.b16 %v350, %v349
    %v360 = vpack.c.b16 %v352, %v351
    %369 = vmatpush.bf16.msra.mxu0 %v360
    %370 = vmatpush.bf16.msra.mxu0 %v359
    %371 = vmatpush.bf16.msra.mxu0 %v358
    %372 = vmatpush.bf16.msra.mxu0 %v357
    %373 = vmatpush.bf16.msra.mxu0 %v356
    %374 = vmatpush.bf16.msra.mxu0 %v355
    %375 = vmatpush.bf16.msra.mxu0 %v354
    %376 = vmatpush.bf16.msra.mxu0 %v353
    %377 = vmatmul.bf16.gmra.mxu0 %v302
    %v378 = vpop.f32.mrf.mxu0
    %v379 = vadd.f32 %v320, %v378
    %v380 = vpop.f32.mrf.mxu0
    %v381 = vadd.f32 %v320, %v380
    %382 = vdwg.mxu0
    %383 = vst [vmem:[#allocation11] sm:$0xff] %v379
    %384 = vst [vmem:[#allocation11 + $0x8] sm:$0xff] %v381
    // Predicated region
    $region46: #{tpu_custom_call.1} parent=1 // pred_check
      _
    $region47: #{tpu_custom_call.1} parent=1 // pred_check_branch
      %386 = sbr.rel (0) target = $region49
    $region48: #{tpu_custom_call.1} parent=1 // pred_region
      %388 = vsyncadd [#allocation4], 0
      %s389 = sshll.u32 [#allocation11], 4
      %s390 = int_to_ptr.vmem [resolvable:$true] %s389
      %s391 = sshll.u32 %s6, 4
      %s392 = int_to_ptr.hbm [resolvable:$true] %s391
      %397 = dma.vmem_to_hbm [thread:$0]  %s390, 256, %s392, [#allocation4], 128, 128, 8
    $region49: #{tpu_custom_call.1} parent=1 // pred_fallthru
      _
    // Predicated region
    $region50: #{tpu_custom_call.1} parent=1 // pred_check
      _
    $region51: #{tpu_custom_call.1} parent=1 // pred_check_branch
      %399 = sbr.rel (0) target = $region53
    $region52: #{tpu_custom_call.1} parent=1 // pred_region
      %401 = dma.done [#allocation4], 256
    $region53: #{tpu_custom_call.1} parent=1 // pred_fallthru
      _
    %402 = vsyncpa [#allocation3], 1
    %403 = vsyncpa [#allocation6], 1
    %404 = vsyncpa [#allocation9], 1
    %405 = vsyncpa [#allocation4], 1

// kernel: tpu_custom_call.1
$region0: #{tpu_custom_call.1}
  #allocation0 [shape = 'u32[]', space=smem, size = 0x4, offset = 0x4, fixed_abs, tag = 'smem constant byte address 0x4 - core index']
  #allocation1 [shape = 'u32[72,128]{1,0:T(1,128)}', space=vmem, size = 0x9000, scoped, tag = 'internal scratch']
  %s0 = inlined_call_operand.hbm [shape: f32[16,16], index: 0, kind: input, shape index: {}]
  %s1 = inlined_call_operand.hbm [shape: bf16[16,128], index: 1, kind: input, shape index: {}]
  %s2 = inlined_call_operand.hbm [shape: bf16[128,128], index: 2, kind: input, shape index: {}]
  %s3 = inlined_call_operand.hbm [shape: bf16[128,128], index: 3, kind: input, shape index: {}]
  %s4 = inlined_call_operand.hbm [shape: bf16[128,128], index: 4, kind: input, shape index: {}]
  %s5 = inlined_call_operand.vmem [shape: f32[4,128], index: 5, kind: input, shape index: {}]
  %s6 = inlined_call_operand.hbm [shape: f32[16,128], index: 6, kind: output, shape index: {}]
  %s7 = sld [smem:[#allocation0]]
  $region54: #{tpu_custom_call.1} parent=0
    _
  %s9 = ssub.s32 1, %s7
  %s10 = scalar_select 0, %s9, %s7
  $region1: #{tpu_custom_call.1} parent=0
    #allocation2 [shape = 'u8[8192]{0}', space=vmem, size = 0x2000, scoped, tag = 'input window, operand 0, single buffered']
    #allocation3 [shape = 's32[1]{0}', space=sflag, size = 0x4, scoped, tag = 'scoped memory for tpu_custom_call.1']
    #allocation4 [shape = 's32[1]{0}', space=sflag, size = 0x4, scoped, tag = 'scoped memory for tpu_custom_call.1']
    #allocation5 [shape = 'u8[4096]{0}', space=vmem, size = 0x1000, scoped, tag = 'input window, operand 1, single buffered']
    #allocation6 [shape = 's32[1]{0}', space=sflag, size = 0x4, scoped, tag = 'scoped memory for tpu_custom_call.1']
    #allocation7 [shape = 'u8[32768]{0}', space=vmem, size = 0x8000, scoped, tag = 'input window, operand 2, single buffered']
    #allocation8 [shape = 'u8[32768]{0}', space=vmem, size = 0x8000, scoped, tag = 'input window, operand 3, single buffered']
    #allocation9 [shape = 's32[1]{0}', space=sflag, size = 0x4, scoped, tag = 'scoped memory for tpu_custom_call.1']
    #allocation10 [shape = 'u8[32768]{0}', space=vmem, size = 0x8000, scoped, tag = 'input window, operand 4, single buffered']
    #allocation11 [shape = 'u8[8192]{0}', space=vmem, size = 0x2000, scoped, tag = 'output window, operand 0, single buffered']
    %11 = vsyncpa [#allocation3], 0
    %12 = vsyncpa [#allocation6], 0
    %13 = vsyncpa [#allocation9], 0
    %14 = vsyncpa [#allocation4], 0
    // Predicated region
    $region2: #{tpu_custom_call.1} parent=1 // pred_check
      _
    $region3: #{tpu_custom_call.1} parent=1 // pred_check_branch
      %16 = sbr.rel (0) target = $region5
    $region4: #{tpu_custom_call.1} parent=1 // pred_region
      %18 = vsyncadd [#allocation3], 0
      %s19 = sshll.u32 %s0, 4
      %s20 = int_to_ptr.hbm [resolvable:$true] %s19
      %s21 = sshll.u32 [#allocation2], 4
      %s22 = int_to_ptr.vmem [resolvable:$true] %s21
      %27 = dma.hbm_to_vmem [thread:$0]  %s20, 256, %s22, [#allocation3], 128, 128, 8
    $region5: #{tpu_custom_call.1} parent=1 // pred_fallthru
      _
    // Predicated region
    $region6: #{tpu_custom_call.1} parent=1 // pred_check
      _
    $region7: #{tpu_custom_call.1} parent=1 // pred_check_branch
      %29 = sbr.rel (0) target = $region9
    $region8: #{tpu_custom_call.1} parent=1 // pred_region
      %31 = vsyncadd [#allocation6], 0
      %s32 = sshll.u32 %s1, 4
      %s33 = int_to_ptr.hbm [resolvable:$true] %s32
      %s34 = sshll.u32 [#allocation5], 4
      %s35 = int_to_ptr.vmem [resolvable:$true] %s34
      %40 = dma.hbm_to_vmem [thread:$0]  %s33, 128, %s35, [#allocation6], 64, 64, 4
    $region9: #{tpu_custom_call.1} parent=1 // pred_fallthru
      _
    // Predicated region
    $region10: #{tpu_custom_call.1} parent=1 // pred_check
      _
    $region11: #{tpu_custom_call.1} parent=1 // pred_check_branch
      %42 = sbr.rel (0) target = $region13
    $region12: #{tpu_custom_call.1} parent=1 // pred_region
      %44 = vsyncadd [#allocation6], 0
      %s45 = sshll.u32 %s2, 4
      %s46 = int_to_ptr.hbm [resolvable:$true] %s45
      %s47 = sshll.u32 [#allocation7], 4
      %s48 = int_to_ptr.vmem [resolvable:$true] %s47
      %53 = dma.hbm_to_vmem [thread:$0]  %s46, 1024, %s48, [#allocation6], 64, 64, 4
    $region13: #{tpu_custom_call.1} parent=1 // pred_fallthru
      _
    // Predicated region
    $region14: #{tpu_custom_call.1} parent=1 // pred_check
      _
    $region15: #{tpu_custom_call.1} parent=1 // pred_check_branch
      %55 = sbr.rel (0) target = $region17
    $region16: #{tpu_custom_call.1} parent=1 // pred_region
      %57 = vsyncadd [#allocation9], 0
      %s58 = sshll.u32 %s3, 4
      %s59 = int_to_ptr.hbm [resolvable:$true] %s58
      %s60 = sshll.u32 [#allocation8], 4
      %s61 = int_to_ptr.vmem [resolvable:$true] %s60
      %66 = dma.hbm_to_vmem [thread:$0]  %s59, 1024, %s61, [#allocation9], 64, 64, 4
    $region17: #{tpu_custom_call.1} parent=1 // pred_fallthru
      _
    // Predicated region
    $region18: #{tpu_custom_call.1} parent=1 // pred_check
      _
    $region19: #{tpu_custom_call.1} parent=1 // pred_check_branch
      %68 = sbr.rel (0) target = $region21
    $region20: #{tpu_custom_call.1} parent=1 // pred_region
      %70 = vsyncadd [#allocation9], 0
      %s71 = sshll.u32 %s4, 4
      %s72 = int_to_ptr.hbm [resolvable:$true] %s71
      %s73 = sshll.u32 [#allocation10], 4
      %s74 = int_to_ptr.vmem [resolvable:$true] %s73
      %79 = dma.hbm_to_vmem [thread:$0]  %s72, 1024, %s74, [#allocation9], 64, 64, 4
    $region21: #{tpu_custom_call.1} parent=1 // pred_fallthru
      _
    // Predicated region
    $region22: #{tpu_custom_call.1} parent=1 // pred_check
      _
    $region23: #{tpu_custom_call.1} parent=1 // pred_check_branch
      %81 = sbr.rel (0) target = $region25
    $region24: #{tpu_custom_call.1} parent=1 // pred_region
      _
    $region25: #{tpu_custom_call.1} parent=1 // pred_fallthru
      _
    // Predicated region
    $region26: #{tpu_custom_call.1} parent=1 // pred_check
      _
    $region27: #{tpu_custom_call.1} parent=1 // pred_check_branch
      %83 = sbr.rel (0) target = $region29
    $region28: #{tpu_custom_call.1} parent=1 // pred_region
      %85 = dma.done [#allocation3], 256
    $region29: #{tpu_custom_call.1} parent=1 // pred_fallthru
      _
    // Predicated region
    $region30: #{tpu_custom_call.1} parent=1 // pred_check
      _
    $region31: #{tpu_custom_call.1} parent=1 // pred_check_branch
      %87 = sbr.rel (0) target = $region33
    $region32: #{tpu_custom_call.1} parent=1 // pred_region
      %89 = dma.done [#allocation6], 128
    $region33: #{tpu_custom_call.1} parent=1 // pred_fallthru
      _
    // Predicated region
    $region34: #{tpu_custom_call.1} parent=1 // pred_check
      _
    $region35: #{tpu_custom_call.1} parent=1 // pred_check_branch
      %91 = sbr.rel (0) target = $region37
    $region36: #{tpu_custom_call.1} parent=1 // pred_region
      %93 = dma.done [#allocation6], 1024
    $region37: #{tpu_custom_call.1} parent=1 // pred_fallthru
      _
    // Predicated region
    $region38: #{tpu_custom_call.1} parent=1 // pred_check
      _
    $region39: #{tpu_custom_call.1} parent=1 // pred_check_branch
      %95 = sbr.rel (0) target = $region41
    $region40: #{tpu_custom_call.1} parent=1 // pred_region
      %97 = dma.done [#allocation9], 1024
    $region41: #{tpu_custom_call.1} parent=1 // pred_fallthru
      _
    // Predicated region
    $region42: #{tpu_custom_call.1} parent=1 // pred_check
      _
    $region43: #{tpu_custom_call.1} parent=1 // pred_check_branch
      %99 = sbr.rel (0) target = $region45
    $region44: #{tpu_custom_call.1} parent=1 // pred_region
      %101 = dma.done [#allocation9], 1024
    $region45: #{tpu_custom_call.1} parent=1 // pred_fallthru
      _
    %v103 = vld [vmem:[#allocation2] sm:$0xff]
    %v104 = vld [vmem:[#allocation2 + $0x8] sm:$0xff]
    %v105 = vpack.c.bf16 %v104, %v103
    %v106 = vld [vmem:[#allocation5] sm:$0xf]
    %v107 = vld [vmem:[#allocation5 + $0x4] sm:$0xf]
    %v108 = vld [vmem:[%s5] sm:$0x1]
    %v109 = vperm.slane %v108, 0
    %v112 = vunpack.c.l.b16 %v106
    %v113 = vunpack.c.l.b16 %v107
    %v114 = vpack.c.b16 %v113, %v112
    %vm116 = vcmask 130048
    %v118 = vsel %vm116, %v105, 0
    %120 = vmatpush.bf16.msra.mxu0 0
    %121 = vmatpush.bf16.msra.mxu0 0
    %122 = vmatpush.bf16.msra.mxu0 0
    %123 = vmatpush.bf16.msra.mxu0 0
    %124 = vmatpush.bf16.msra.mxu0 0
    %125 = vmatpush.bf16.msra.mxu0 0
    %126 = vmatpush.bf16.msra.mxu0 0
    %127 = vmatpush.bf16.msra.mxu0 %v114
    %128 = vmatmul.bf16.gmra.mxu0 %v118
    %v129 = vpop.f32.mrf.mxu0
    %v130 = vadd.f32 %v109, %v129
    %v131 = vpop.f32.mrf.mxu0
    %v132 = vadd.f32 %v109, %v131
    %133 = vdwg.mxu0
    %v134 = vmax.f32 %v130, 0.0
    %v135 = vmax.f32 %v132, 0.0
    %v136 = vpack.c.bf16 %v135, %v134
    %v137 = vld [vmem:[#allocation7] sm:$0xf]
    %v138 = vld [vmem:[#allocation7 + $0x4] sm:$0xf]
    %v139 = vld [vmem:[#allocation7 + $0x8] sm:$0xf]
    %v140 = vld [vmem:[#allocation7 + $0xc] sm:$0xf]
    %v141 = vld [vmem:[#allocation7 + $0x10] sm:$0xf]
    %v142 = vld [vmem:[#allocation7 + $0x14] sm:$0xf]
    %v143 = vld [vmem:[#allocation7 + $0x18] sm:$0xf]
    %v144 = vld [vmem:[#allocation7 + $0x1c] sm:$0xf]
    %v145 = vld [vmem:[#allocation7 + $0x20] sm:$0xf]
    %v146 = vld [vmem:[#allocation7 + $0x24] sm:$0xf]
    %v147 = vld [vmem:[#allocation7 + $0x28] sm:$0xf]
    %v148 = vld [vmem:[#allocation7 + $0x2c] sm:$0xf]
    %v149 = vld [vmem:[#allocation7 + $0x30] sm:$0xf]
    %v150 = vld [vmem:[#allocation7 + $0x34] sm:$0xf]
    %v151 = vld [vmem:[#allocation7 + $0x38] sm:$0xf]
    %v152 = vld [vmem:[#allocation7 + $0x3c] sm:$0xf]
    %v153 = vld [vmem:[%s5 + $0x1] sm:$0x1]
    %v154 = vperm.slane %v153, 0
    %v171 = vunpack.c.l.b16 %v137
    %v172 = vunpack.c.l.b16 %v138
    %v173 = vunpack.c.l.b16 %v139
    %v174 = vunpack.c.l.b16 %v140
    %v175 = vunpack.c.l.b16 %v141
    %v176 = vunpack.c.l.b16 %v142
    %v177 = vunpack.c.l.b16 %v143
    %v178 = vunpack.c.l.b16 %v144
    %v179 = vunpack.c.l.b16 %v145
    %v180 = vunpack.c.l.b16 %v146
    %v181 = vunpack.c.l.b16 %v147
    %v182 = vunpack.c.l.b16 %v148
    %v183 = vunpack.c.l.b16 %v149
    %v184 = vunpack.c.l.b16 %v150
    %v185 = vunpack.c.l.b16 %v151
    %v186 = vunpack.c.l.b16 %v152
    %v187 = vpack.c.b16 %v172, %v171
    %v188 = vpack.c.b16 %v174, %v173
    %v189 = vpack.c.b16 %v176, %v175
    %v190 = vpack.c.b16 %v178, %v177
    %v191 = vpack.c.b16 %v180, %v179
    %v192 = vpack.c.b16 %v182, %v181
    %v193 = vpack.c.b16 %v184, %v183
    %v194 = vpack.c.b16 %v186, %v185
    %203 = vmatpush.bf16.msra.mxu0 %v194
    %204 = vmatpush.bf16.msra.mxu0 %v193
    %205 = vmatpush.bf16.msra.mxu0 %v192
    %206 = vmatpush.bf16.msra.mxu0 %v191
    %207 = vmatpush.bf16.msra.mxu0 %v190
    %208 = vmatpush.bf16.msra.mxu0 %v189
    %209 = vmatpush.bf16.msra.mxu0 %v188
    %210 = vmatpush.bf16.msra.mxu0 %v187
    %211 = vmatmul.bf16.gmra.mxu0 %v136
    %v212 = vpop.f32.mrf.mxu0
    %v213 = vadd.f32 %v154, %v212
    %v214 = vpop.f32.mrf.mxu0
    %v215 = vadd.f32 %v154, %v214
    %216 = vdwg.mxu0
    %v217 = vmax.f32 %v213, 0.0
    %v218 = vmax.f32 %v215, 0.0
    %v219 = vpack.c.bf16 %v218, %v217
    %v220 = vld [vmem:[#allocation8] sm:$0xf]
    %v221 = vld [vmem:[#allocation8 + $0x4] sm:$0xf]
    %v222 = vld [vmem:[#allocation8 + $0x8] sm:$0xf]
    %v223 = vld [vmem:[#allocation8 + $0xc] sm:$0xf]
    %v224 = vld [vmem:[#allocation8 + $0x10] sm:$0xf]
    %v225 = vld [vmem:[#allocation8 + $0x14] sm:$0xf]
    %v226 = vld [vmem:[#allocation8 + $0x18] sm:$0xf]
    %v227 = vld [vmem:[#allocation8 + $0x1c] sm:$0xf]
    %v228 = vld [vmem:[#allocation8 + $0x20] sm:$0xf]
    %v229 = vld [vmem:[#allocation8 + $0x24] sm:$0xf]
    %v230 = vld [vmem:[#allocation8 + $0x28] sm:$0xf]
    %v231 = vld [vmem:[#allocation8 + $0x2c] sm:$0xf]
    %v232 = vld [vmem:[#allocation8 + $0x30] sm:$0xf]
    %v233 = vld [vmem:[#allocation8 + $0x34] sm:$0xf]
    %v234 = vld [vmem:[#allocation8 + $0x38] sm:$0xf]
    %v235 = vld [vmem:[#allocation8 + $0x3c] sm:$0xf]
    %v236 = vld [vmem:[%s5 + $0x2] sm:$0x1]
    %v237 = vperm.slane %v236, 0
    %v254 = vunpack.c.l.b16 %v220
    %v255 = vunpack.c.l.b16 %v221
    %v256 = vunpack.c.l.b16 %v222
    %v257 = vunpack.c.l.b16 %v223
    %v258 = vunpack.c.l.b16 %v224
    %v259 = vunpack.c.l.b16 %v225
    %v260 = vunpack.c.l.b16 %v226
    %v261 = vunpack.c.l.b16 %v227
    %v262 = vunpack.c.l.b16 %v228
    %v263 = vunpack.c.l.b16 %v229
    %v264 = vunpack.c.l.b16 %v230
    %v265 = vunpack.c.l.b16 %v231
    %v266 = vunpack.c.l.b16 %v232
    %v267 = vunpack.c.l.b16 %v233
    %v268 = vunpack.c.l.b16 %v234
    %v269 = vunpack.c.l.b16 %v235
    %v270 = vpack.c.b16 %v255, %v254
    %v271 = vpack.c.b16 %v257, %v256
    %v272 = vpack.c.b16 %v259, %v258
    %v273 = vpack.c.b16 %v261, %v260
    %v274 = vpack.c.b16 %v263, %v262
    %v275 = vpack.c.b16 %v265, %v264
    %v276 = vpack.c.b16 %v267, %v266
    %v277 = vpack.c.b16 %v269, %v268
    %286 = vmatpush.bf16.msra.mxu0 %v277
    %287 = vmatpush.bf16.msra.mxu0 %v276
    %288 = vmatpush.bf16.msra.mxu0 %v275
    %289 = vmatpush.bf16.msra.mxu0 %v274
    %290 = vmatpush.bf16.msra.mxu0 %v273
    %291 = vmatpush.bf16.msra.mxu0 %v272
    %292 = vmatpush.bf16.msra.mxu0 %v271
    %293 = vmatpush.bf16.msra.mxu0 %v270
    %294 = vmatmul.bf16.gmra.mxu0 %v219
    %v295 = vpop.f32.mrf.mxu0
    %v296 = vadd.f32 %v237, %v295
    %v297 = vpop.f32.mrf.mxu0
    %v298 = vadd.f32 %v237, %v297
    %299 = vdwg.mxu0
    %v300 = vmax.f32 %v296, 0.0
    %v301 = vmax.f32 %v298, 0.0
    %v302 = vpack.c.bf16 %v301, %v300
    %v303 = vld [vmem:[#allocation10] sm:$0xf]
    %v304 = vld [vmem:[#allocation10 + $0x4] sm:$0xf]
    %v305 = vld [vmem:[#allocation10 + $0x8] sm:$0xf]
    %v306 = vld [vmem:[#allocation10 + $0xc] sm:$0xf]
    %v307 = vld [vmem:[#allocation10 + $0x10] sm:$0xf]
    %v308 = vld [vmem:[#allocation10 + $0x14] sm:$0xf]
    %v309 = vld [vmem:[#allocation10 + $0x18] sm:$0xf]
    %v310 = vld [vmem:[#allocation10 + $0x1c] sm:$0xf]
    %v311 = vld [vmem:[#allocation10 + $0x20] sm:$0xf]
    %v312 = vld [vmem:[#allocation10 + $0x24] sm:$0xf]
    %v313 = vld [vmem:[#allocation10 + $0x28] sm:$0xf]
    %v314 = vld [vmem:[#allocation10 + $0x2c] sm:$0xf]
    %v315 = vld [vmem:[#allocation10 + $0x30] sm:$0xf]
    %v316 = vld [vmem:[#allocation10 + $0x34] sm:$0xf]
    %v317 = vld [vmem:[#allocation10 + $0x38] sm:$0xf]
    %v318 = vld [vmem:[#allocation10 + $0x3c] sm:$0xf]
    %v319 = vld [vmem:[%s5 + $0x3] sm:$0x1]
    %v320 = vperm.slane %v319, 0
    %v337 = vunpack.c.l.b16 %v303
    %v338 = vunpack.c.l.b16 %v304
    %v339 = vunpack.c.l.b16 %v305
    %v340 = vunpack.c.l.b16 %v306
    %v341 = vunpack.c.l.b16 %v307
    %v342 = vunpack.c.l.b16 %v308
    %v343 = vunpack.c.l.b16 %v309
    %v344 = vunpack.c.l.b16 %v310
    %v345 = vunpack.c.l.b16 %v311
    %v346 = vunpack.c.l.b16 %v312
    %v347 = vunpack.c.l.b16 %v313
    %v348 = vunpack.c.l.b16 %v314
    %v349 = vunpack.c.l.b16 %v315
    %v350 = vunpack.c.l.b16 %v316
    %v351 = vunpack.c.l.b16 %v317
    %v352 = vunpack.c.l.b16 %v318
    %v353 = vpack.c.b16 %v338, %v337
    %v354 = vpack.c.b16 %v340, %v339
    %v355 = vpack.c.b16 %v342, %v341
    %v356 = vpack.c.b16 %v344, %v343
    %v357 = vpack.c.b16 %v346, %v345
    %v358 = vpack.c.b16 %v348, %v347
    %v359 = vpack.c.b16 %v350, %v349
    %v360 = vpack.c.b16 %v352, %v351
    %369 = vmatpush.bf16.msra.mxu0 %v360
    %370 = vmatpush.bf16.msra.mxu0 %v359
    %371 = vmatpush.bf16.msra.mxu0 %v358
    %372 = vmatpush.bf16.msra.mxu0 %v357
    %373 = vmatpush.bf16.msra.mxu0 %v356
    %374 = vmatpush.bf16.msra.mxu0 %v355
    %375 = vmatpush.bf16.msra.mxu0 %v354
    %376 = vmatpush.bf16.msra.mxu0 %v353
    %377 = vmatmul.bf16.gmra.mxu0 %v302
    %v378 = vpop.f32.mrf.mxu0
    %v379 = vadd.f32 %v320, %v378
    %v380 = vpop.f32.mrf.mxu0
    %v381 = vadd.f32 %v320, %v380
    %382 = vdwg.mxu0
    %383 = vst [vmem:[#allocation11] sm:$0xff] %v379
    %384 = vst [vmem:[#allocation11 + $0x8] sm:$0xff] %v381
    // Predicated region
    $region46: #{tpu_custom_call.1} parent=1 // pred_check
      _
    $region47: #{tpu_custom_call.1} parent=1 // pred_check_branch
      %386 = sbr.rel (0) target = $region49
    $region48: #{tpu_custom_call.1} parent=1 // pred_region
      %388 = vsyncadd [#allocation4], 0
      %s389 = sshll.u32 [#allocation11], 4
      %s390 = int_to_ptr.vmem [resolvable:$true] %s389
      %s391 = sshll.u32 %s6, 4
      %s392 = int_to_ptr.hbm [resolvable:$true] %s391
      %397 = dma.vmem_to_hbm [thread:$0]  %s390, 256, %s392, [#allocation4], 128, 128, 8
    $region49: #{tpu_custom_call.1} parent=1 // pred_fallthru
      _
    // Predicated region
    $region50: #{tpu_custom_call.1} parent=1 // pred_check
      _
    $region51: #{tpu_custom_call.1} parent=1 // pred_check_branch
      %399 = sbr.rel (0) target = $region53
    $region52: #{tpu_custom_call.1} parent=1 // pred_region
      %401 = dma.done [#allocation4], 256
    $region53: #{tpu_custom_call.1} parent=1 // pred_fallthru
      _
    %402 = vsyncpa [#allocation3], 1
    %403 = vsyncpa [#allocation6], 1
    %404 = vsyncpa [#allocation9], 1
    %405 = vsyncpa [#allocation4], 1

</llo_original>
